<compile_context>
chip_gen: v7x
topology: tpu7x:2x2x1
jax: 0.10.0
libtpu: 0.0.40
codegen_flags: <defaults>
</compile_context>

<pallas_src>
import functools

import jax
import jax.numpy as jnp
from jax.experimental import pallas as pl
from jax.experimental.pallas import tpu as pltpu


def shared_dropout_kernel(x_ref, keep_ref, o_ref, *, scale):
    # keep_ref block: (1, 1, CH) -- same block across the inner row axis.
    # x_ref / o_ref block: (1, TR, CH).
    m = keep_ref[...] * scale                           # fold 1/(1-p) into the mask tile
    o_ref[...] = (x_ref[...] * m).astype(o_ref.dtype)   # broadcast along the row axis


def _tpu_params():
    """(vmem_budget_bytes, num_tensorcores) with conservative fallbacks."""
    budget = 12 << 20          # fits every generation's scoped VMEM default
    num_cores = 1
    try:
        info = pltpu.get_tpu_info()
        cap = getattr(info, "vmem_capacity_bytes", None)
        if cap is not None:
            if cap <= (64 << 20):          # v7x: 64 MiB physical per TC, 2 TCs/chip
                budget, num_cores = 20 << 20, 2
            else:                          # v5e / v6e: 128 MiB physical, 1 TC/chip
                budget = 24 << 20
    except Exception:
        pass                               # no TPU info at trace time -> safe defaults
    return budget, num_cores


def _choose_row_tile(R, row_bytes, budget_bytes, pack, num_cores):
    """Largest TR dividing R with TR % pack == 0 (or TR == R) whose
    double-buffered x/out blocks (+ mask) fit `budget_bytes`.  On 2-TC chips,
    prefer an even number of grid steps >= 4 so both TensorCores get
    pipelined work; on 1-TC chips a single big step is best."""
    def fits(tr):
        # 2 buffers each for the x and out blocks, plus the double-buffered mask.
        return (4 * tr + 2) * row_bytes <= budget_bytes

    divisors = [d for d in range(1, R + 1) if R % d == 0]
    aligned = [d for d in divisors if d % pack == 0 or d == R]
    valid = [d for d in aligned if fits(d)]

    if valid:
        if num_cores >= 2:
            multi = [d for d in valid if R // d >= 4 and (R // d) % 2 == 0]
            if multi:
                return max(multi)
        return max(valid)
    # Nothing fits the budget: smallest aligned tile; vmem_limit_bytes headroom
    # (set in the wrapper) keeps this compileable rather than silently failing.
    return min(aligned)


def shared_dropout(x: jax.Array, keep_mask: jax.Array, p: float,
                   *, vmem_budget_bytes: int | None = None,
                   donate_x: bool = False) -> jax.Array:
    """x: [B, R, C, H]; keep_mask: [B, 1, C, H] with 0/1 entries; shared_dim=1."""
    B, R, C, H = x.shape
    assert keep_mask.shape == (B, 1, C, H)
    assert p < 1.0, "p == 1.0 not supported (output would be all zeros)"
    CH = C * H
    scale = 1.0 / (1.0 - p)

    budget, num_cores = _tpu_params()
    if vmem_budget_bytes is not None:
        budget = vmem_budget_bytes

    # Lane-dense view: trailing dim CH is a large multiple of 128 and the
    # size-1 shared dim is squeezed out of the tiling problem.
    x2 = x.reshape(B, R, CH)
    m2 = keep_mask.reshape(B, 1, CH).astype(x.dtype)    # keep everything in x's dtype

    itemsize = jnp.dtype(x.dtype).itemsize
    pack = max(8, 32 // itemsize)      # sublane multiple: 8 f32, 16 bf16, 32 int8/fp8
    row_bytes = CH * itemsize          # B lives in the grid, not the block
    TR = _choose_row_tile(R, row_bytes, budget, pack, num_cores)

    kernel = functools.partial(shared_dropout_kernel, scale=scale)
    out2 = pl.pallas_call(
        kernel,
        out_shape=jax.ShapeDtypeStruct((B, R, CH), x.dtype),
        # r is the innermost (fastest) grid axis: the (1, 1, CH) mask block index
        # is unchanged across it, so Pallas only re-fetches the mask B times.
        grid=(B, R // TR),
        in_specs=[
            # x: one batch element, TR rows per grid step; last two block dims
            # (TR, CH) satisfy the (8,128)-multiple rule (or full extent).
            pl.BlockSpec((1, TR, CH), lambda b, r: (b, r, 0)),
            # shared mask: same block for every r step of a given b.
            pl.BlockSpec((1, 1, CH), lambda b, r: (b, 0, 0)),
        ],
        out_specs=pl.BlockSpec((1, TR, CH), lambda b, r: (b, r, 0)),
        input_output_aliases=({0: 0} if donate_x else {}),
        compiler_params=pltpu.CompilerParams(
            dimension_semantics=("parallel", "parallel"),
            vmem_limit_bytes=budget + (4 << 20),        # block budget + headroom
        ),
    )(x2, m2)
    return out2.reshape(B, R, C, H)


if __name__ == "__main__":
    key = jax.random.PRNGKey(0)
    kx, km = jax.random.split(key)

    B, R, C, H = 2, 32, 8, 32        # CH = 256 -> lane-dense trailing axis
    p = 0.25
    shared_dim = 1

    x = jax.random.normal(kx, (B, R, C, H), dtype=jnp.float32)

    # Glue (what nn.Dropout does to a ones-mask): shared Bernoulli keep-mask.
    mask_shape = list(x.shape)
    mask_shape[shared_dim] = 1
    keep = jax.random.bernoulli(km, 1.0 - p, tuple(mask_shape)).astype(jnp.float32)

    out = shared_dropout(x, keep, p)
    out = jax.block_until_ready(out)

    # Reference: exactly what the PyTorch module computes with the same mask.
    ref = x * (keep / (1.0 - p))
    assert out.shape == x.shape and out.dtype == x.dtype
    assert jnp.allclose(out, ref, atol=1e-6), "Pallas output mismatch vs reference"

    print("KERNEL_OK")
</pallas_src>

<mosaic_0001>
module attributes {stable_mosaic.version = 11 : i64} {
  func.func @shared_dropout_kernel(%arg0: i32, %arg1: i32, %arg2: memref<1x32x256xf32, #tpu.memory_space<vmem>>, %arg3: memref<1x1x256xf32, #tpu.memory_space<vmem>>, %arg4: memref<1x32x256xf32, #tpu.memory_space<vmem>>) attributes {dimension_semantics = [#tpu.dimension_semantics<parallel>, #tpu.dimension_semantics<parallel>], iteration_bounds = array<i64: 2, 1>, scalar_prefetch = 0 : i64, scratch_operands = 0 : i64, tpu.core_type = #tpu.core_type<tc>, window_params = [{transform_indices = @transform_0, window_bounds = array<i64: 1, 32, 256>}, {transform_indices = @transform_1, window_bounds = array<i64: 1, 1, 256>}, {transform_indices = @transform_2, window_bounds = array<i64: 1, 32, 256>}]} {
    %c0 = arith.constant 0 : index
    %c0_0 = arith.constant 0 : index
    %c0_1 = arith.constant 0 : index
    %0 = vector.load %arg3[%c0, %c0_0, %c0_1] : memref<1x1x256xf32, #tpu.memory_space<vmem>>, vector<1x1x256xf32>
    %cst = arith.constant 1.33333337 : f32
    %1 = vector.broadcast %cst : f32 to vector<1x1x256xf32>
    %2 = arith.mulf %0, %1 : vector<1x1x256xf32>
    %c0_2 = arith.constant 0 : index
    %c0_3 = arith.constant 0 : index
    %c0_4 = arith.constant 0 : index
    %3 = vector.load %arg2[%c0_2, %c0_3, %c0_4] : memref<1x32x256xf32, #tpu.memory_space<vmem>>, vector<1x32x256xf32>
    %4 = vector.broadcast %2 : vector<1x1x256xf32> to vector<1x32x256xf32>
    %5 = arith.mulf %3, %4 : vector<1x32x256xf32>
    %c0_5 = arith.constant 0 : index
    %c0_6 = arith.constant 0 : index
    %c0_7 = arith.constant 0 : index
    %6 = vector.load %arg4[%c0_5, %c0_6, %c0_7] : memref<1x32x256xf32, #tpu.memory_space<vmem>>, vector<1x32x256xf32>
    tpu.vector_store %arg4[%c0_5, %c0_6, %c0_7], %5 {strides = array<i32>} : memref<1x32x256xf32, #tpu.memory_space<vmem>>, vector<1x32x256xf32>,
    return
  }
  func.func @transform_0(%arg0: i32, %arg1: i32) -> (i32, i32, i32) {
    %c0_i32 = arith.constant 0 : i32
    %c0_i32_0 = arith.constant 0 : i32
    return %arg0, %arg1, %c0_i32 : i32, i32, i32
  }
  func.func @transform_1(%arg0: i32, %arg1: i32) -> (i32, i32, i32) {
    %c0_i32 = arith.constant 0 : i32
    %c0_i32_0 = arith.constant 0 : i32
    %c0_i32_1 = arith.constant 0 : i32
    return %arg0, %c0_i32, %c0_i32_0 : i32, i32, i32
  }
  func.func @transform_2(%arg0: i32, %arg1: i32) -> (i32, i32, i32) {
    %c0_i32 = arith.constant 0 : i32
    %c0_i32_0 = arith.constant 0 : i32
    return %arg0, %arg1, %c0_i32 : i32, i32, i32
  }
}

</mosaic_0001>

<llo_original>
// kernel: tpu_custom_call.1
$region0: #{tpu_custom_call.1}
  #allocation0 [shape = 'u32[]', space=smem, size = 0x4, offset = 0x4, fixed_abs, tag = 'smem constant byte address 0x4 - core index']
  #allocation1 [shape = 'u32[144,128]{1,0:T(1,128)}', space=vmem, size = 0x12000, scoped, tag = 'internal scratch']
  %s0 = inlined_call_operand.hbm [shape: f32[2,32,256], index: 0, kind: input, shape index: {}]
  %s1 = inlined_call_operand.hbm [shape: f32[2,1,256], index: 1, kind: input, shape index: {}]
  %s2 = inlined_call_operand.hbm [shape: f32[2,32,256], index: 2, kind: output, shape index: {}]
  %s3 = sld [smem:[#allocation0]]
  $region49: #{tpu_custom_call.1} parent=0
    _
  %s5 = ssub.s32 1, %s3
  %s6 = scalar_select 0, %s5, %s3
  $region1: #{tpu_custom_call.1} parent=0
    #allocation2 [shape = 'u8[65536]{0}', space=vmem, size = 0x10000, scoped, tag = 'input window, operand 0']
    #allocation3 [shape = 's32[2]{0}', space=sflag, size = 0x8, scoped, tag = 'scoped memory for tpu_custom_call.1']
    #allocation4 [shape = 's32[2]{0}', space=sflag, size = 0x8, scoped, tag = 'scoped memory for tpu_custom_call.1']
    #allocation5 [shape = 'u8[2048]{0}', space=vmem, size = 0x800, scoped, tag = 'input window, operand 1']
    #allocation6 [shape = 's32[2]{0}', space=sflag, size = 0x8, scoped, tag = 'scoped memory for tpu_custom_call.1']
    #allocation7 [shape = 'u8[65536]{0}', space=vmem, size = 0x10000, scoped, tag = 'output window, operand 0']
    %7 = vsyncpa [#allocation3], 0
    %s8 = scalar_lea.sflag [#allocation3], 1
    %9 = vsyncpa %s8, 0
    %10 = vsyncpa [#allocation6], 0
    %s11 = scalar_lea.sflag [#allocation6], 1
    %12 = vsyncpa %s11, 0
    %13 = vsyncpa [#allocation4], 0
    %s14 = scalar_lea.sflag [#allocation4], 1
    %15 = vsyncpa %s14, 0
    loop: start=0, step=1, limit=4
    $region2: #{tpu_custom_call.1} parent=1 // loop_pre_header
      _
    $region3: #{tpu_custom_call.1} parent=1 // loop_header
      %s17 = sphi 0, %s21
      %p18 = scmp.ge.s32.totalorder %s17, 4
      %s24 = sphi 0, %s36
      %s25 = sphi 0, %s32
      %s26 = sphi 0, %s24
      %s27 = sphi 0, %s25
      %s28 = sphi 0, %s26
      %s29 = sphi 0, %s27
      %s41 = sphi 0, %s43
      %s44 = sphi 0, %s41
      %s45 = sphi 0, %s44
      %s61 = sphi 0, %s45
      %s67 = sphi 0, %s69
      %s70 = sphi 0, %s67
      %s71 = sphi 0, %s70
      %s87 = sphi 0, %s71
      %s95 = sphi 0, %s97
      %s98 = sphi 0, %s95
      %s99 = sphi 0, %s98
      %s115 = sphi 0, %s99
    $region4: #{tpu_custom_call.1} parent=1 // loop_header_branch
      %20 = sbr.rel (%p18) target = $region8
    $region5: #{tpu_custom_call.1} parent=1 // loop_body
      %s22 = ssub.s32 %s17, 1
      %s23 = ssub.s32 %s17, 2
      %s30 = sadd.s32 1, %s25
      %p31 = scmp.ge.s32.totalorder %s30, 1
      %s32 = scalar_select %p31, 0, %s30
      %s33 = sadd.s32 1, %s24
      %s34 = scalar_select %p31, %s33, %s24
      %p35 = scmp.ge.s32.totalorder %s34, 2
      %s36 = scalar_select %p35, 0, %s34
      %s37 = ssub.s32 %s24, %s36
      %s38 = ssub.s32 %s25, %s32
      %s39 = sor.u32 %s37, %s38
      %p40 = scmp.eq.s32.totalorder %s39, 0
      %s42 = sadd.s32 %s41, 1
      %s43 = scalar_select %p40, %s41, %s42
      %p46 = pneg %p40
      %p47 = scmp.eq.s32.totalorder %s17, 1
      %p48 = por %p46, %p47
      %p49 = scmp.ne.s32.totalorder %s41, %s44
      %p50 = scmp.eq.s32.totalorder %s17, 0
      %p51 = por %p49, %p50
      %p52 = scmp.ne.s32.totalorder %s41, %s44
      %p53 = scmp.eq.s32.totalorder %s22, 1
      %p54 = por %p52, %p53
      %p55 = scmp.ne.s32.totalorder %s44, %s45
      %p56 = scmp.eq.s32.totalorder %s22, 0
      %p57 = por %p55, %p56
      %p58 = scmp.ne.s32.totalorder %s44, %s45
      %p59 = scmp.eq.s32.totalorder %s23, 1
      %p60 = por %p58, %p59
      %p62 = scmp.ne.s32.totalorder %s45, %s61
      %p63 = scmp.eq.s32.totalorder %s23, 0
      %p64 = por %p62, %p63
      %s65 = ssub.s32 %s24, %s36
      %p66 = scmp.eq.s32.totalorder %s65, 0
      %s68 = sadd.s32 %s67, 1
      %s69 = scalar_select %p66, %s67, %s68
      %p72 = pneg %p66
      %p73 = scmp.eq.s32.totalorder %s17, 1
      %p74 = por %p72, %p73
      %p75 = scmp.ne.s32.totalorder %s67, %s70
      %p76 = scmp.eq.s32.totalorder %s17, 0
      %p77 = por %p75, %p76
      %p78 = scmp.ne.s32.totalorder %s67, %s70
      %p79 = scmp.eq.s32.totalorder %s22, 1
      %p80 = por %p78, %p79
      %p81 = scmp.ne.s32.totalorder %s70, %s71
      %p82 = scmp.eq.s32.totalorder %s22, 0
      %p83 = por %p81, %p82
      %p84 = scmp.ne.s32.totalorder %s70, %s71
      %p85 = scmp.eq.s32.totalorder %s23, 1
      %p86 = por %p84, %p85
      %p88 = scmp.ne.s32.totalorder %s71, %s87
      %p89 = scmp.eq.s32.totalorder %s23, 0
      %p90 = por %p88, %p89
      %s91 = ssub.s32 %s24, %s36
      %s92 = ssub.s32 %s25, %s32
      %s93 = sor.u32 %s91, %s92
      %p94 = scmp.eq.s32.totalorder %s93, 0
      %s96 = sadd.s32 %s95, 1
      %s97 = scalar_select %p94, %s95, %s96
      %p100 = pneg %p94
      %p101 = scmp.eq.s32.totalorder %s17, 1
      %p102 = por %p100, %p101
      %p103 = scmp.ne.s32.totalorder %s95, %s98
      %p104 = scmp.eq.s32.totalorder %s17, 0
      %p105 = por %p103, %p104
      %p106 = scmp.ne.s32.totalorder %s95, %s98
      %p107 = scmp.eq.s32.totalorder %s22, 1
      %p108 = por %p106, %p107
      %p109 = scmp.ne.s32.totalorder %s98, %s99
      %p110 = scmp.eq.s32.totalorder %s22, 0
      %p111 = por %p109, %p110
      %p112 = scmp.ne.s32.totalorder %s98, %s99
      %p113 = scmp.eq.s32.totalorder %s23, 1
      %p114 = por %p112, %p113
      %p116 = scmp.ne.s32.totalorder %s99, %s115
      %p117 = scmp.eq.s32.totalorder %s23, 0
      %p118 = por %p116, %p117
      %p119 = scmp.le.s32.totalorder 1, %s17
      %p120 = scmp.lt.s32.totalorder %s17, 3
      %p121 = pnand %p119, %p120
      %p122 = pneg %p121
      // Predicated region
      $region9: #{tpu_custom_call.1} parent=5 // pred_check
        _
      $region10: #{tpu_custom_call.1} parent=5 // pred_check_branch
        %124 = sbr.rel (%p121) target = $region12
      $region11: #{tpu_custom_call.1} parent=5 // pred_region
        %s125 = ssub.s32 %s17, 1
      $region12: #{tpu_custom_call.1} parent=5 // pred_fallthru
        _
      %p126 = scmp.lt.s32.totalorder %s17, 2
      // Predicated region
      $region13: #{tpu_custom_call.1} parent=5 // pred_check
        %p127 = pneg %p126
      $region14: #{tpu_custom_call.1} parent=5 // pred_check_branch
        %129 = sbr.rel (%p127) target = $region16
      $region15: #{tpu_custom_call.1} parent=5 // pred_region
        // Predicated region
        $region17: #{tpu_custom_call.1} parent=15 // pred_check
          %p130 = pneg %p51
        $region18: #{tpu_custom_call.1} parent=15 // pred_check_branch
          %132 = sbr.rel (%p130) target = $region20
        $region19: #{tpu_custom_call.1} parent=15 // pred_region
          %s133 = sand.u32 %s41, 1
          %s134 = scalar_lea.sflag [#allocation3], %s133
          %s135 = sand.u32 %s41, 1
          %s136 = smul.addr %s135, 64
          %s137 = scalar_lea.vmem [#allocation2], %s136
          %s138 = smul.u32 4, %s25
          %s140 = ssub.s32 1024, 1024
          %141 = vsyncadd %s134, %s140
          %s142 = smul.addr %s138, 2
          %s143 = smul.addr %s24, 8
          %s144 = sadd.s32 %s142, %s143
          %s145 = smul.addr %s144, 128
          %s146 = scalar_lea.hbm %s0, %s145
          %s147 = sshll.u32 %s137, 4
          %s148 = int_to_ptr.vmem [resolvable:$true] %s147
          %153 = dma.hbm_to_vmem [thread:$0]  %s146, 1024, %s148, %s134, 256, 256, 16
        $region20: #{tpu_custom_call.1} parent=15 // pred_fallthru
          _
        // Predicated region
        $region21: #{tpu_custom_call.1} parent=15 // pred_check
          %p154 = pneg %p77
        $region22: #{tpu_custom_call.1} parent=15 // pred_check_branch
          %156 = sbr.rel (%p154) target = $region24
        $region23: #{tpu_custom_call.1} parent=15 // pred_region
          %s157 = sand.u32 %s67, 1
          %s158 = scalar_lea.sflag [#allocation6], %s157
          %s159 = sand.u32 %s67, 1
          %s160 = smul.addr %s159, 2
          %s161 = scalar_lea.vmem [#allocation5], %s160
          %s163 = ssub.s32 32, 32
          %164 = vsyncadd %s158, %s163
          %s165 = smul.addr %s24, 2
          %s166 = smul.addr %s165, 16
          %s167 = scalar_lea.hbm %s1, %s166
          %s169 = sshll.u32 %s161, 4
          %s170 = int_to_ptr.vmem [resolvable:$true] %s169
          %172 = dma.hbm_to_vmem [thread:$0]  %s167, 32, %s170, %s158
        $region24: #{tpu_custom_call.1} parent=15 // pred_fallthru
          _
      $region16: #{tpu_custom_call.1} parent=5 // pred_fallthru
        _
      %p173 = scmp.le.s32.totalorder 1, %s17
      %p174 = scmp.lt.s32.totalorder %s17, 3
      %p175 = pnand %p173, %p174
      %p176 = pneg %p175
      // Predicated region
      $region25: #{tpu_custom_call.1} parent=5 // pred_check
        _
      $region26: #{tpu_custom_call.1} parent=5 // pred_check_branch
        %178 = sbr.rel (%p175) target = $region28
      $region27: #{tpu_custom_call.1} parent=5 // pred_region
        %s179 = ssub.s32 %s17, 1
        %s180 = sand.u32 %s44, 1
        %s181 = scalar_lea.sflag [#allocation3], %s180
        %s182 = sand.u32 %s44, 1
        %s183 = smul.addr %s182, 64
        %s184 = scalar_lea.vmem [#allocation2], %s183
        // Predicated region
        $region29: #{tpu_custom_call.1} parent=27 // pred_check
          %p185 = pneg %p57
        $region30: #{tpu_custom_call.1} parent=27 // pred_check_branch
          %187 = sbr.rel (%p185) target = $region32
        $region31: #{tpu_custom_call.1} parent=27 // pred_region
          %188 = dma.done %s181, 1024
        $region32: #{tpu_custom_call.1} parent=27 // pred_fallthru
          _
        %s189 = sand.u32 %s70, 1
        %s190 = scalar_lea.sflag [#allocation6], %s189
        %s191 = sand.u32 %s70, 1
        %s192 = smul.addr %s191, 2
        %s193 = scalar_lea.vmem [#allocation5], %s192
        // Predicated region
        $region33: #{tpu_custom_call.1} parent=27 // pred_check
          %p194 = pneg %p83
        $region34: #{tpu_custom_call.1} parent=27 // pred_check_branch
          %196 = sbr.rel (%p194) target = $region36
        $region35: #{tpu_custom_call.1} parent=27 // pred_region
          %197 = dma.done %s190, 32
        $region36: #{tpu_custom_call.1} parent=27 // pred_fallthru
          _
        %s198 = sand.u32 %s44, 1
        %s199 = scalar_lea.sflag [#allocation3], %s198
        %s200 = sand.u32 %s44, 1
        %s201 = smul.addr %s200, 64
        %s202 = scalar_lea.vmem [#allocation2], %s201
        %p203 = pneg %p57
        %p204 = pneg %p54
        %s205 = sand.u32 %s70, 1
        %s206 = scalar_lea.sflag [#allocation6], %s205
        %s207 = sand.u32 %s70, 1
        %s208 = smul.addr %s207, 2
        %s209 = scalar_lea.vmem [#allocation5], %s208
        %p210 = pneg %p83
        %p211 = pneg %p80
        %p212 = pneg %p111
        %p213 = pneg %p108
        %s214 = sand.u32 %s98, 1
        %s215 = scalar_lea.sflag [#allocation4], %s214
        %s216 = sand.u32 %s98, 1
        %s217 = smul.addr %s216, 64
        %s218 = scalar_lea.vmem [#allocation7], %s217
        %s219 = smul.u32 4, %s27
        %s220 = smul.u32 4, %s27
        %v221 = vld [vmem:[%s193] sm:$0x3]
        %v222 = vmul.f32 %v221, 1.3333334
        %v223 = vld [vmem:[%s184] sm:$0xff]
        %v224 = vld [vmem:[%s184 + $0x8] sm:$0xff]
        %v225 = vld [vmem:[%s184 + $0x10] sm:$0xff]
        %v226 = vld [vmem:[%s184 + $0x18] sm:$0xff]
        %v227 = vld [vmem:[%s184 + $0x20] sm:$0xff]
        %v228 = vld [vmem:[%s184 + $0x28] sm:$0xff]
        %v229 = vld [vmem:[%s184 + $0x30] sm:$0xff]
        %v230 = vld [vmem:[%s184 + $0x38] sm:$0xff]
        %v232 = vlaneseq
        %v233 = vshrl.u32 %v232, 7
        %v234 = vsub.s32 0, %v233
        %v235 = vrot.slane %v222, %v234
        %v236 = vlaneseq
        %v237 = vshrl.u32 %v236, 7
        %v238 = vsub.s32 1, %v237
        %v239 = vrot.slane %v222, %v238
        %v242 = vmul.f32 %v223, %v235
        %v243 = vmul.f32 %v224, %v239
        %v244 = vmul.f32 %v225, %v235
        %v245 = vmul.f32 %v226, %v239
        %v246 = vmul.f32 %v227, %v235
        %v247 = vmul.f32 %v228, %v239
        %v248 = vmul.f32 %v229, %v235
        %v249 = vmul.f32 %v230, %v239
        %250 = vst [vmem:[%s218] sm:$0xff] %v242
        %251 = vst [vmem:[%s218 + $0x8] sm:$0xff] %v243
        %252 = vst [vmem:[%s218 + $0x10] sm:$0xff] %v244
        %253 = vst [vmem:[%s218 + $0x18] sm:$0xff] %v245
        %254 = vst [vmem:[%s218 + $0x20] sm:$0xff] %v246
        %255 = vst [vmem:[%s218 + $0x28] sm:$0xff] %v247
        %256 = vst [vmem:[%s218 + $0x30] sm:$0xff] %v248
        %257 = vst [vmem:[%s218 + $0x38] sm:$0xff] %v249
        %s258 = sand.u32 %s98, 1
        %s259 = scalar_lea.sflag [#allocation4], %s258
        %s260 = sand.u32 %s98, 1
        %s261 = smul.addr %s260, 64
        %s262 = scalar_lea.vmem [#allocation7], %s261
        // Predicated region
        $region37: #{tpu_custom_call.1} parent=27 // pred_check
          %p263 = pneg %p108
        $region38: #{tpu_custom_call.1} parent=27 // pred_check_branch
          %265 = sbr.rel (%p263) target = $region40
        $region39: #{tpu_custom_call.1} parent=27 // pred_region
          %s266 = smul.u32 4, %s27
          %s268 = ssub.s32 1024, 1024
          %269 = vsyncadd %s259, %s268
          %s270 = smul.addr %s266, 2
          %s271 = smul.addr %s26, 8
          %s272 = sadd.s32 %s270, %s271
          %s273 = smul.addr %s272, 128
          %s274 = scalar_lea.hbm %s2, %s273
          %s275 = sshll.u32 %s262, 4
          %s276 = int_to_ptr.vmem [resolvable:$true] %s275
          %281 = dma.vmem_to_hbm [thread:$0]  %s276, 1024, %s274, %s259, 256, 256, 16
        $region40: #{tpu_custom_call.1} parent=27 // pred_fallthru
          _
      $region28: #{tpu_custom_call.1} parent=5 // pred_fallthru
        _
      %p282 = scmp.le.s32.totalorder 2, %s17
      // Predicated region
      $region41: #{tpu_custom_call.1} parent=5 // pred_check
        %p283 = pneg %p282
      $region42: #{tpu_custom_call.1} parent=5 // pred_check_branch
        %285 = sbr.rel (%p283) target = $region44
      $region43: #{tpu_custom_call.1} parent=5 // pred_region
        %s286 = ssub.s32 %s17, 2
        // Predicated region
        $region45: #{tpu_custom_call.1} parent=43 // pred_check
          %p287 = pneg %p114
        $region46: #{tpu_custom_call.1} parent=43 // pred_check_branch
          %289 = sbr.rel (%p287) target = $region48
        $region47: #{tpu_custom_call.1} parent=43 // pred_region
          %s290 = sand.u32 %s99, 1
          %s291 = scalar_lea.sflag [#allocation4], %s290
          %s292 = sand.u32 %s99, 1
          %s293 = smul.addr %s292, 64
          %s294 = scalar_lea.vmem [#allocation7], %s293
          %295 = dma.done %s291, 1024
        $region48: #{tpu_custom_call.1} parent=43 // pred_fallthru
          _
      $region44: #{tpu_custom_call.1} parent=5 // pred_fallthru
        _
    $region6: #{tpu_custom_call.1} parent=1 // loop_footer
      %s21 = sadd.s32 1, %s17
    $region7: #{tpu_custom_call.1} parent=1 // loop_footer_branch
      %16 = sbr.rel target = $region3
    $region8: #{tpu_custom_call.1} parent=1 // loop_exit
      _
    %296 = vsyncpa [#allocation3], 1
    %s297 = scalar_lea.sflag [#allocation3], 1
    %298 = vsyncpa %s297, 1
    %299 = vsyncpa [#allocation6], 1
    %s300 = scalar_lea.sflag [#allocation6], 1
    %301 = vsyncpa %s300, 1
    %302 = vsyncpa [#allocation4], 1
    %s303 = scalar_lea.sflag [#allocation4], 1
    %304 = vsyncpa %s303, 1

</llo_original>
